<compile_context>
chip_gen: v7x
topology: tpu7x:2x2x1
jax: 0.10.0
libtpu: 0.0.40
codegen_flags: <defaults>
</compile_context>

<pallas_src>
import jax
import jax.numpy as jnp
from jax.experimental import pallas as pl
from jax.experimental.pallas import tpu as pltpu

_LANE = 128
_VPU_C_MAX = 64                   # channel count at/below which the VPU path wins
_BLOCK_BYTES = 2 * 1024 * 1024    # ~2 MiB input block; x2 double-buffer -> v7x-safe
_TINY_BYTES = 1 << 20             # below this, plain XLA beats pallas_call overhead


def _conv1x1_vpu_kernel(x_ref, w_ref, b_ref, o_ref):
    """Small-C path.

    x_ref: (1, C, TH, 128) VMEM; w_ref: (C,) SMEM; b_ref: (1,) SMEM;
    o_ref: (1, TH, 128) VMEM.
    """
    c_total = x_ref.shape[1]
    acc = x_ref[0, 0].astype(jnp.float32) * w_ref[0]
    for c in range(1, c_total):           # unrolled at trace time (C is static)
        acc = acc + x_ref[0, c].astype(jnp.float32) * w_ref[c]
    o_ref[0] = (acc + b_ref[0]).astype(o_ref.dtype)


def _conv1x1_mxu_kernel(x_ref, w_ref, b_ref, o_ref):
    """Large-C path.

    x_ref: (1, C, THW) VMEM; w_ref: (1, C) VMEM; b_ref: (1,) SMEM;
    o_ref: (1, 1, THW) VMEM.
    """
    out = jnp.dot(w_ref[...], x_ref[0], preferred_element_type=jnp.float32)
    o_ref[0] = (out + b_ref[0]).astype(o_ref.dtype)


def fully_conv_layer(x_nchw, weight, bias, *, force_pallas=False):
    """PyTorch FullyConvLayer forward: nn.Conv2d(c, 1, 1)(x).

    x_nchw: (B, C, H, W); weight: (1, C, 1, 1); bias: (1,).
    Returns (B, 1, H, W).
    """
    B, C, H, W = x_nchw.shape
    dtype = x_nchw.dtype
    itemsize = jnp.dtype(dtype).itemsize
    HW = H * W

    w_vec = weight.reshape(C).astype(jnp.float32)   # SMEM scalars (VPU path)
    b_vec = bias.reshape(1).astype(jnp.float32)

    # Tiny-problem escape hatch: pallas_call fixed overhead > total HBM bytes.
    if not force_pallas and B * C * HW * itemsize < _TINY_BYTES:
        out = jnp.einsum("bchw,c->bhw", x_nchw.astype(jnp.float32), w_vec) + b_vec[0]
        return out.astype(dtype).reshape(B, 1, H, W)

    sub = 8 if itemsize == 4 else 16                 # sublane multiple (16 for bf16)
    smem_spec = pl.BlockSpec(memory_space=pltpu.MemorySpace.SMEM)

    if C <= _VPU_C_MAX:
        # ---------------- small C: sublane-dense VPU weighted sum ----------------
        R = -(-HW // _LANE)                          # rows of 128 lanes (lane-padded)
        th_cap = max(sub, (_BLOCK_BYTES // (C * _LANE * itemsize)) // sub * sub)
        if R <= th_cap:
            TH, Rp = R, R                            # block == full dim (OK for R < 8)
        else:
            TH = th_cap
            Rp = -(-R // TH) * TH
        pad = Rp * _LANE - HW
        x = x_nchw.reshape(B, C, HW)
        if pad:
            x = jnp.pad(x, ((0, 0), (0, 0), (0, pad)))
        x = x.reshape(B, C, Rp, _LANE)

        out = pl.pallas_call(
            _conv1x1_vpu_kernel,
            out_shape=jax.ShapeDtypeStruct((B, Rp, _LANE), dtype),
            grid=(B, Rp // TH),
            in_specs=[
                pl.BlockSpec((1, C, TH, _LANE), lambda b, s: (b, 0, s, 0)),
                smem_spec,                           # weight scalars in SMEM
                smem_spec,                           # bias scalar in SMEM
            ],
            out_specs=pl.BlockSpec((1, TH, _LANE), lambda b, s: (b, s, 0)),
            compiler_params=pltpu.CompilerParams(
                dimension_semantics=("parallel", "parallel")),
            cost_estimate=pl.CostEstimate(
                flops=2 * B * C * Rp * _LANE,
                transcendentals=0,
                bytes_accessed=(B * C + B) * Rp * _LANE * itemsize),
        )(x, w_vec, b_vec)
        out = out.reshape(B, Rp * _LANE)[:, :HW]
        return out.reshape(B, 1, H, W)

    # ---------------- large C: MXU dot per (C, THW) slab ----------------
    # TODO(synk): add a C (reduction) grid axis if a single (C, 8*128) slab ever
    # exceeds the VMEM budget (extremely large C); keeping C whole avoids
    # reduction bookkeeping for all realistic channel counts.
    thw_cap = max(_LANE, (_BLOCK_BYTES // (C * itemsize)) // _LANE * _LANE)
    HWp = -(-HW // _LANE) * _LANE
    if HWp <= thw_cap:
        THW, HWt = HWp, HWp
    else:
        THW = thw_cap
        HWt = -(-HWp // THW) * THW
    pad = HWt - HW
    x = x_nchw.reshape(B, C, HW)
    if pad:
        x = jnp.pad(x, ((0, 0), (0, 0), (0, pad)))
    w2 = weight.reshape(1, C).astype(dtype)

    out = pl.pallas_call(
        _conv1x1_mxu_kernel,
        out_shape=jax.ShapeDtypeStruct((B, 1, HWt), dtype),
        grid=(B, HWt // THW),
        in_specs=[
            pl.BlockSpec((1, C, THW), lambda b, s: (b, 0, s)),
            pl.BlockSpec((1, C), lambda b, s: (0, 0)),
            smem_spec,                               # bias scalar in SMEM
        ],
        out_specs=pl.BlockSpec((1, 1, THW), lambda b, s: (b, 0, s)),
        compiler_params=pltpu.CompilerParams(
            dimension_semantics=("parallel", "parallel")),
        cost_estimate=pl.CostEstimate(
            flops=2 * B * C * HWt,
            transcendentals=0,
            bytes_accessed=(B * C + B) * HWt * itemsize),
    )(x, w2, b_vec)
    return out[:, :, :HW].reshape(B, 1, H, W)


if __name__ == "__main__":
    key = jax.random.PRNGKey(0)

    # --- test 1: module shapes (small C -> VPU weighted-sum path) ---
    B, C, H, W = 2, 4, 16, 16
    kx, kw, kb, kx2, kw2, kb2 = jax.random.split(key, 6)
    x = jax.random.normal(kx, (B, C, H, W), jnp.float32)
    weight = 0.1 * jax.random.normal(kw, (1, C, 1, 1), jnp.float32)
    bias = 0.1 * jax.random.normal(kb, (1,), jnp.float32)

    out = fully_conv_layer(x, weight, bias, force_pallas=True)
    out = jax.block_until_ready(out)
    assert out.shape == (B, 1, H, W), out.shape
    ref = (jnp.einsum("bchw,oc->bohw", x, weight.reshape(1, C))
           + bias.reshape(1, 1, 1, 1))
    assert jnp.allclose(out, ref, atol=1e-5, rtol=1e-5)

    # --- test 2: large C -> MXU path ---
    B2, C2, H2, W2 = 1, 256, 32, 32
    x2 = jax.random.normal(kx2, (B2, C2, H2, W2), jnp.float32)
    weight2 = 0.05 * jax.random.normal(kw2, (1, C2, 1, 1), jnp.float32)
    bias2 = 0.1 * jax.random.normal(kb2, (1,), jnp.float32)

    out2 = fully_conv_layer(x2, weight2, bias2, force_pallas=True)
    out2 = jax.block_until_ready(out2)
    assert out2.shape == (B2, 1, H2, W2), out2.shape
    ref2 = (jnp.einsum("bchw,oc->bohw", x2, weight2.reshape(1, C2))
            + bias2.reshape(1, 1, 1, 1))
    assert jnp.allclose(out2, ref2, atol=1e-2, rtol=1e-2)

    print("KERNEL_OK")
</pallas_src>

<mosaic_0001>
module attributes {stable_mosaic.version = 11 : i64} {
  func.func @_conv1x1_vpu_kernel(%arg0: i32, %arg1: i32, %arg2: memref<1x4x2x128xf32, #tpu.memory_space<vmem>>, %arg3: memref<4xf32, #tpu.memory_space<smem>>, %arg4: memref<1xf32, #tpu.memory_space<smem>>, %arg5: memref<1x2x128xf32, #tpu.memory_space<vmem>>) attributes {dimension_semantics = [#tpu.dimension_semantics<parallel>, #tpu.dimension_semantics<parallel>], iteration_bounds = array<i64: 2, 1>, scalar_prefetch = 0 : i64, scratch_operands = 0 : i64, tpu.core_type = #tpu.core_type<tc>, window_params = [{transform_indices = @transform_0, window_bounds = array<i64: 1, 4, 2, 128>}, {transform_indices = @transform_1, window_bounds = array<i64: 4>}, {transform_indices = @transform_2, window_bounds = array<i64: 1>}, {transform_indices = @transform_3, window_bounds = array<i64: 1, 2, 128>}]} {
    %c0 = arith.constant 0 : index
    %c0_0 = arith.constant 0 : index
    %c0_1 = arith.constant 0 : index
    %c0_2 = arith.constant 0 : index
    %0 = vector.load %arg2[%c0, %c0_0, %c0_1, %c0_2] : memref<1x4x2x128xf32, #tpu.memory_space<vmem>>, vector<1x1x2x128xf32>
    %1 = vector.shape_cast %0 : vector<1x1x2x128xf32> to vector<2x128xf32>
    %c0_3 = arith.constant 0 : index
    %2 = memref.load %arg3[%c0_3] : memref<4xf32, #tpu.memory_space<smem>>
    %3 = vector.broadcast %2 : f32 to vector<2x128xf32>
    %4 = arith.mulf %1, %3 : vector<2x128xf32>
    %c0_4 = arith.constant 0 : index
    %c1 = arith.constant 1 : index
    %c0_5 = arith.constant 0 : index
    %c0_6 = arith.constant 0 : index
    %5 = vector.load %arg2[%c0_4, %c1, %c0_5, %c0_6] : memref<1x4x2x128xf32, #tpu.memory_space<vmem>>, vector<1x1x2x128xf32>
    %6 = vector.shape_cast %5 : vector<1x1x2x128xf32> to vector<2x128xf32>
    %c1_7 = arith.constant 1 : index
    %7 = memref.load %arg3[%c1_7] : memref<4xf32, #tpu.memory_space<smem>>
    %8 = vector.broadcast %7 : f32 to vector<2x128xf32>
    %9 = arith.mulf %6, %8 : vector<2x128xf32>
    %10 = arith.addf %4, %9 : vector<2x128xf32>
    %c0_8 = arith.constant 0 : index
    %c2 = arith.constant 2 : index
    %c0_9 = arith.constant 0 : index
    %c0_10 = arith.constant 0 : index
    %11 = vector.load %arg2[%c0_8, %c2, %c0_9, %c0_10] : memref<1x4x2x128xf32, #tpu.memory_space<vmem>>, vector<1x1x2x128xf32>
    %12 = vector.shape_cast %11 : vector<1x1x2x128xf32> to vector<2x128xf32>
    %c2_11 = arith.constant 2 : index
    %13 = memref.load %arg3[%c2_11] : memref<4xf32, #tpu.memory_space<smem>>
    %14 = vector.broadcast %13 : f32 to vector<2x128xf32>
    %15 = arith.mulf %12, %14 : vector<2x128xf32>
    %16 = arith.addf %10, %15 : vector<2x128xf32>
    %c0_12 = arith.constant 0 : index
    %c3 = arith.constant 3 : index
    %c0_13 = arith.constant 0 : index
    %c0_14 = arith.constant 0 : index
    %17 = vector.load %arg2[%c0_12, %c3, %c0_13, %c0_14] : memref<1x4x2x128xf32, #tpu.memory_space<vmem>>, vector<1x1x2x128xf32>
    %18 = vector.shape_cast %17 : vector<1x1x2x128xf32> to vector<2x128xf32>
    %c3_15 = arith.constant 3 : index
    %19 = memref.load %arg3[%c3_15] : memref<4xf32, #tpu.memory_space<smem>>
    %20 = vector.broadcast %19 : f32 to vector<2x128xf32>
    %21 = arith.mulf %18, %20 : vector<2x128xf32>
    %22 = arith.addf %16, %21 : vector<2x128xf32>
    %c0_16 = arith.constant 0 : index
    %23 = memref.load %arg4[%c0_16] : memref<1xf32, #tpu.memory_space<smem>>
    %24 = vector.broadcast %23 : f32 to vector<2x128xf32>
    %25 = arith.addf %22, %24 : vector<2x128xf32>
    %c0_17 = arith.constant 0 : index
    %c0_18 = arith.constant 0 : index
    %c0_19 = arith.constant 0 : index
    %26 = vector.load %arg5[%c0_17, %c0_18, %c0_19] : memref<1x2x128xf32, #tpu.memory_space<vmem>>, vector<1x2x128xf32>
    %27 = vector.shape_cast %26 : vector<1x2x128xf32> to vector<2x128xf32>
    %28 = vector.shape_cast %25 : vector<2x128xf32> to vector<1x2x128xf32>
    tpu.vector_store %arg5[%c0_17, %c0_18, %c0_19], %28 {strides = array<i32>} : memref<1x2x128xf32, #tpu.memory_space<vmem>>, vector<1x2x128xf32>,
    return
  }
  func.func @transform_0(%arg0: i32, %arg1: i32) -> (i32, i32, i32, i32) {
    %c0_i32 = arith.constant 0 : i32
    %c0_i32_0 = arith.constant 0 : i32
    %c0_i32_1 = arith.constant 0 : i32
    return %arg0, %c0_i32, %arg1, %c0_i32_0 : i32, i32, i32, i32
  }
  func.func @transform_1(%arg0: i32, %arg1: i32) -> i32 {
    %c0_i32 = arith.constant 0 : i32
    %c0_i32_0 = arith.constant 0 : i32
    return %c0_i32 : i32
  }
  func.func @transform_2(%arg0: i32, %arg1: i32) -> i32 {
    %c0_i32 = arith.constant 0 : i32
    %c0_i32_0 = arith.constant 0 : i32
    return %c0_i32 : i32
  }
  func.func @transform_3(%arg0: i32, %arg1: i32) -> (i32, i32, i32) {
    %c0_i32 = arith.constant 0 : i32
    %c0_i32_0 = arith.constant 0 : i32
    return %arg0, %arg1, %c0_i32 : i32, i32, i32
  }
}

</mosaic_0001>

<llo_original>
// kernel: tpu_custom_call.1
$region0: #{tpu_custom_call.1}
  #allocation0 [shape = 'u32[]', space=smem, size = 0x4, offset = 0x4, fixed_abs, tag = 'smem constant byte address 0x4 - core index']
  #allocation1 [shape = 'u32[144,128]{1,0:T(1,128)}', space=vmem, size = 0x12000, scoped, tag = 'internal scratch']
  #allocation2 [shape = 'f32[1]{0:T(128)S(6)}', space=smem, size = 0x200, scoped, tag = 'scoped memory for tpu_custom_call.1']
  %s0 = inlined_call_operand.hbm [shape: f32[2,4,2,128], index: 0, kind: input, shape index: {}]
  %s1 = inlined_call_operand.vmem [shape: f32[4], index: 1, kind: input, shape index: {}]
  %s2 = inlined_call_operand.<no memory space> [shape: f32[1], index: 2, kind: input, shape index: {}]
  %s3 = inlined_call_operand.hbm [shape: f32[2,2,128], index: 3, kind: output, shape index: {}]
  %s4 = sld [smem:[#allocation0]]
  $region53: #{tpu_custom_call.1} parent=0
    _
  %s6 = ssub.s32 1, %s4
  %s7 = scalar_select 0, %s6, %s4
  %8 = sst [smem:[#allocation2]] %s2
  $region1: #{tpu_custom_call.1} parent=0
    #allocation3 [shape = 'u8[8192]{0}', space=vmem, size = 0x2000, scoped, tag = 'input window, operand 0']
    #allocation4 [shape = 's32[2]{0}', space=sflag, size = 0x8, scoped, tag = 'scoped memory for tpu_custom_call.1']
    #allocation5 [shape = 's32[2]{0}', space=sflag, size = 0x8, scoped, tag = 'scoped memory for tpu_custom_call.1']
    #allocation6 [shape = 's32[2]{0}', space=sflag, size = 0x8, scoped, tag = 'scoped memory for tpu_custom_call.1']
    #allocation7 [shape = 'u8[512]{0}', space=smem, size = 0x200, scoped, tag = 'input window, operand 1, single buffered']
    #allocation8 [shape = 'u8[2048]{0}', space=vmem, size = 0x800, scoped, tag = 'output window, operand 0']
    %9 = vsyncpa [#allocation4], 0
    %s10 = scalar_lea.sflag [#allocation4], 1
    %11 = vsyncpa %s10, 0
    %12 = vsyncpa [#allocation6], 0
    %13 = vsyncpa [#allocation5], 0
    %s14 = scalar_lea.sflag [#allocation5], 1
    %15 = vsyncpa %s14, 0
    loop: start=0, step=1, limit=4
    $region2: #{tpu_custom_call.1} parent=1 // loop_pre_header
      _
    $region3: #{tpu_custom_call.1} parent=1 // loop_header
      %s17 = sphi 0, %s21
      %p18 = scmp.ge.s32.totalorder %s17, 4
      %s24 = sphi 0, %s36
      %s25 = sphi 0, %s32
      %s26 = sphi 0, %s24
      %s27 = sphi 0, %s25
      %s28 = sphi 0, %s26
      %s29 = sphi 0, %s27
      %s41 = sphi 0, %s43
      %s44 = sphi 0, %s41
      %s45 = sphi 0, %s44
      %s61 = sphi 0, %s45
      %s65 = sphi 0, %s65
      %s67 = sphi 0, %s65
      %s68 = sphi 0, %s67
      %s82 = sphi 0, %s68
      %s86 = sphi 0, %s86
      %s88 = sphi 0, %s86
      %s89 = sphi 0, %s88
      %s103 = sphi 0, %s89
      %s111 = sphi 0, %s113
      %s114 = sphi 0, %s111
      %s115 = sphi 0, %s114
      %s131 = sphi 0, %s115
    $region4: #{tpu_custom_call.1} parent=1 // loop_header_branch
      %20 = sbr.rel (%p18) target = $region8
    $region5: #{tpu_custom_call.1} parent=1 // loop_body
      %s22 = ssub.s32 %s17, 1
      %s23 = ssub.s32 %s17, 2
      %s30 = sadd.s32 1, %s25
      %p31 = scmp.ge.s32.totalorder %s30, 1
      %s32 = scalar_select %p31, 0, %s30
      %s33 = sadd.s32 1, %s24
      %s34 = scalar_select %p31, %s33, %s24
      %p35 = scmp.ge.s32.totalorder %s34, 2
      %s36 = scalar_select %p35, 0, %s34
      %s37 = ssub.s32 %s24, %s36
      %s38 = ssub.s32 %s25, %s32
      %s39 = sor.u32 %s37, %s38
      %p40 = scmp.eq.s32.totalorder %s39, 0
      %s42 = sadd.s32 %s41, 1
      %s43 = scalar_select %p40, %s41, %s42
      %p46 = pneg %p40
      %p47 = scmp.eq.s32.totalorder %s17, 1
      %p48 = por %p46, %p47
      %p49 = scmp.ne.s32.totalorder %s41, %s44
      %p50 = scmp.eq.s32.totalorder %s17, 0
      %p51 = por %p49, %p50
      %p52 = scmp.ne.s32.totalorder %s41, %s44
      %p53 = scmp.eq.s32.totalorder %s22, 1
      %p54 = por %p52, %p53
      %p55 = scmp.ne.s32.totalorder %s44, %s45
      %p56 = scmp.eq.s32.totalorder %s22, 0
      %p57 = por %p55, %p56
      %p58 = scmp.ne.s32.totalorder %s44, %s45
      %p59 = scmp.eq.s32.totalorder %s23, 1
      %p60 = por %p58, %p59
      %p62 = scmp.ne.s32.totalorder %s45, %s61
      %p63 = scmp.eq.s32.totalorder %s23, 0
      %p64 = por %p62, %p63
      %s66 = sadd.s32 %s65, 1
      %p69 = scmp.eq.s32.totalorder %s17, 1
      %p70 = scmp.ne.s32.totalorder %s65, %s67
      %p71 = scmp.eq.s32.totalorder %s17, 0
      %p72 = por %p70, %p71
      %p73 = scmp.ne.s32.totalorder %s65, %s67
      %p74 = scmp.eq.s32.totalorder %s22, 1
      %p75 = por %p73, %p74
      %p76 = scmp.ne.s32.totalorder %s67, %s68
      %p77 = scmp.eq.s32.totalorder %s22, 0
      %p78 = por %p76, %p77
      %p79 = scmp.ne.s32.totalorder %s67, %s68
      %p80 = scmp.eq.s32.totalorder %s23, 1
      %p81 = por %p79, %p80
      %p83 = scmp.ne.s32.totalorder %s68, %s82
      %p84 = scmp.eq.s32.totalorder %s23, 0
      %p85 = por %p83, %p84
      %s87 = sadd.s32 %s86, 1
      %p90 = scmp.eq.s32.totalorder %s17, 1
      %p91 = scmp.ne.s32.totalorder %s86, %s88
      %p92 = scmp.eq.s32.totalorder %s17, 0
      %p93 = por %p91, %p92
      %p94 = scmp.ne.s32.totalorder %s86, %s88
      %p95 = scmp.eq.s32.totalorder %s22, 1
      %p96 = por %p94, %p95
      %p97 = scmp.ne.s32.totalorder %s88, %s89
      %p98 = scmp.eq.s32.totalorder %s22, 0
      %p99 = por %p97, %p98
      %p100 = scmp.ne.s32.totalorder %s88, %s89
      %p101 = scmp.eq.s32.totalorder %s23, 1
      %p102 = por %p100, %p101
      %p104 = scmp.ne.s32.totalorder %s89, %s103
      %p105 = scmp.eq.s32.totalorder %s23, 0
      %p106 = por %p104, %p105
      %s107 = ssub.s32 %s24, %s36
      %s108 = ssub.s32 %s25, %s32
      %s109 = sor.u32 %s107, %s108
      %p110 = scmp.eq.s32.totalorder %s109, 0
      %s112 = sadd.s32 %s111, 1
      %s113 = scalar_select %p110, %s111, %s112
      %p116 = pneg %p110
      %p117 = scmp.eq.s32.totalorder %s17, 1
      %p118 = por %p116, %p117
      %p119 = scmp.ne.s32.totalorder %s111, %s114
      %p120 = scmp.eq.s32.totalorder %s17, 0
      %p121 = por %p119, %p120
      %p122 = scmp.ne.s32.totalorder %s111, %s114
      %p123 = scmp.eq.s32.totalorder %s22, 1
      %p124 = por %p122, %p123
      %p125 = scmp.ne.s32.totalorder %s114, %s115
      %p126 = scmp.eq.s32.totalorder %s22, 0
      %p127 = por %p125, %p126
      %p128 = scmp.ne.s32.totalorder %s114, %s115
      %p129 = scmp.eq.s32.totalorder %s23, 1
      %p130 = por %p128, %p129
      %p132 = scmp.ne.s32.totalorder %s115, %s131
      %p133 = scmp.eq.s32.totalorder %s23, 0
      %p134 = por %p132, %p133
      %p135 = scmp.le.s32.totalorder 1, %s17
      %p136 = scmp.lt.s32.totalorder %s17, 3
      %p137 = pnand %p135, %p136
      %p138 = pneg %p137
      // Predicated region
      $region9: #{tpu_custom_call.1} parent=5 // pred_check
        _
      $region10: #{tpu_custom_call.1} parent=5 // pred_check_branch
        %140 = sbr.rel (%p137) target = $region12
      $region11: #{tpu_custom_call.1} parent=5 // pred_region
        %s141 = ssub.s32 %s17, 1
        // Predicated region
        $region13: #{tpu_custom_call.1} parent=11 // pred_check
          %p142 = pneg %p78
        $region14: #{tpu_custom_call.1} parent=11 // pred_check_branch
          %144 = sbr.rel (%p142) target = $region16
        $region15: #{tpu_custom_call.1} parent=11 // pred_region
          %s146 = ssub.s32 16, 16
          %147 = vsyncadd [#allocation6], %s146
          %s149 = sshll.u32 %s1, 4
          %s150 = int_to_ptr.vmem [resolvable:$true] %s149
          %152 = dma.vmem_to_smem %s150, 16, [#allocation7], [#allocation6]
        $region16: #{tpu_custom_call.1} parent=11 // pred_fallthru
          _
        // Predicated region
        $region17: #{tpu_custom_call.1} parent=11 // pred_check
          %p153 = pneg %p99
        $region18: #{tpu_custom_call.1} parent=11 // pred_check_branch
          %155 = sbr.rel (%p153) target = $region20
        $region19: #{tpu_custom_call.1} parent=11 // pred_region
          _
        $region20: #{tpu_custom_call.1} parent=11 // pred_fallthru
          _
      $region12: #{tpu_custom_call.1} parent=5 // pred_fallthru
        _
      %p156 = scmp.lt.s32.totalorder %s17, 2
      // Predicated region
      $region21: #{tpu_custom_call.1} parent=5 // pred_check
        %p157 = pneg %p156
      $region22: #{tpu_custom_call.1} parent=5 // pred_check_branch
        %159 = sbr.rel (%p157) target = $region24
      $region23: #{tpu_custom_call.1} parent=5 // pred_region
        // Predicated region
        $region25: #{tpu_custom_call.1} parent=23 // pred_check
          %p160 = pneg %p51
        $region26: #{tpu_custom_call.1} parent=23 // pred_check_branch
          %162 = sbr.rel (%p160) target = $region28
        $region27: #{tpu_custom_call.1} parent=23 // pred_region
          %s163 = sand.u32 %s41, 1
          %s164 = scalar_lea.sflag [#allocation4], %s163
          %s165 = sand.u32 %s41, 1
          %s166 = smul.addr %s165, 8
          %s167 = scalar_lea.vmem [#allocation3], %s166
          %s169 = ssub.s32 128, 128
          %170 = vsyncadd %s164, %s169
          %s171 = smul.addr %s24, 4
          %s172 = sadd.s32 %s25, %s171
          %s173 = smul.addr %s172, 32
          %s174 = scalar_lea.hbm %s0, %s173
          %s175 = sshll.u32 %s167, 4
          %s176 = int_to_ptr.vmem [resolvable:$true] %s175
          %181 = dma.hbm_to_vmem [thread:$0]  %s174, 128, %s176, %s164, 32, 32, 2
        $region28: #{tpu_custom_call.1} parent=23 // pred_fallthru
          _
      $region24: #{tpu_custom_call.1} parent=5 // pred_fallthru
        _
      %p182 = scmp.le.s32.totalorder 1, %s17
      %p183 = scmp.lt.s32.totalorder %s17, 3
      %p184 = pnand %p182, %p183
      %p185 = pneg %p184
      // Predicated region
      $region29: #{tpu_custom_call.1} parent=5 // pred_check
        _
      $region30: #{tpu_custom_call.1} parent=5 // pred_check_branch
        %187 = sbr.rel (%p184) target = $region32
      $region31: #{tpu_custom_call.1} parent=5 // pred_region
        %s188 = ssub.s32 %s17, 1
        %s189 = sand.u32 %s44, 1
        %s190 = scalar_lea.sflag [#allocation4], %s189
        %s191 = sand.u32 %s44, 1
        %s192 = smul.addr %s191, 8
        %s193 = scalar_lea.vmem [#allocation3], %s192
        // Predicated region
        $region33: #{tpu_custom_call.1} parent=31 // pred_check
          %p194 = pneg %p57
        $region34: #{tpu_custom_call.1} parent=31 // pred_check_branch
          %196 = sbr.rel (%p194) target = $region36
        $region35: #{tpu_custom_call.1} parent=31 // pred_region
          %197 = dma.done %s190, 128
        $region36: #{tpu_custom_call.1} parent=31 // pred_fallthru
          _
        // Predicated region
        $region37: #{tpu_custom_call.1} parent=31 // pred_check
          %p198 = pneg %p78
        $region38: #{tpu_custom_call.1} parent=31 // pred_check_branch
          %200 = sbr.rel (%p198) target = $region40
        $region39: #{tpu_custom_call.1} parent=31 // pred_region
          %201 = dma.done [#allocation6], 16
        $region40: #{tpu_custom_call.1} parent=31 // pred_fallthru
          _
        %202 = sfence
        %s203 = sand.u32 %s44, 1
        %s204 = scalar_lea.sflag [#allocation4], %s203
        %s205 = sand.u32 %s44, 1
        %s206 = smul.addr %s205, 8
        %s207 = scalar_lea.vmem [#allocation3], %s206
        %p208 = pneg %p57
        %p209 = pneg %p54
        %p210 = pneg %p78
        %p211 = pneg %p75
        %p212 = pneg %p99
        %p213 = pneg %p96
        %p214 = pneg %p127
        %p215 = pneg %p124
        %s216 = sand.u32 %s114, 1
        %s217 = scalar_lea.sflag [#allocation5], %s216
        %s218 = sand.u32 %s114, 1
        %s219 = smul.addr %s218, 2
        %s220 = scalar_lea.vmem [#allocation8], %s219
        %v221 = vld [vmem:[%s193] sm:$0x3]
        %s222 = sld [smem:[#allocation7]]
        %v223 = vstv %s222
        %v224 = vmul.f32 %v221, %v223
        %s225 = scalar_lea.vmem %s193, 2 [#allocation3]
        %v226 = vld [vmem:[%s225] sm:$0x3]
        %s227 = sld [smem:[#allocation7 + $0x1]]
        %v228 = vstv %s227
        %v229 = vmul.f32 %v226, %v228
        %v230 = vadd.f32 %v224, %v229
        %s231 = scalar_lea.vmem %s193, 4 [#allocation3]
        %v232 = vld [vmem:[%s231] sm:$0x3]
        %s233 = sld [smem:[#allocation7 + $0x2]]
        %v234 = vstv %s233
        %v235 = vmul.f32 %v232, %v234
        %v236 = vadd.f32 %v230, %v235
        %s237 = scalar_lea.vmem %s193, 6 [#allocation3]
        %v238 = vld [vmem:[%s237] sm:$0x3]
        %s239 = sld [smem:[#allocation7 + $0x3]]
        %v240 = vstv %s239
        %v241 = vmul.f32 %v238, %v240
        %v242 = vadd.f32 %v236, %v241
        %s243 = sld [smem:[#allocation2]]
        %v244 = vstv %s243
        %v245 = vadd.f32 %v242, %v244
        %246 = vst [vmem:[%s220] sm:$0x3] %v245
        %s247 = sand.u32 %s114, 1
        %s248 = scalar_lea.sflag [#allocation5], %s247
        %s249 = sand.u32 %s114, 1
        %s250 = smul.addr %s249, 2
        %s251 = scalar_lea.vmem [#allocation8], %s250
        // Predicated region
        $region41: #{tpu_custom_call.1} parent=31 // pred_check
          %p252 = pneg %p124
        $region42: #{tpu_custom_call.1} parent=31 // pred_check_branch
          %254 = sbr.rel (%p252) target = $region44
        $region43: #{tpu_custom_call.1} parent=31 // pred_region
          %s256 = ssub.s32 32, 32
          %257 = vsyncadd %s248, %s256
          %s258 = sadd.s32 %s27, %s26
          %s259 = smul.addr %s258, 32
          %s260 = scalar_lea.hbm %s3, %s259
          %s262 = sshll.u32 %s251, 4
          %s263 = int_to_ptr.vmem [resolvable:$true] %s262
          %265 = dma.vmem_to_hbm [thread:$0]  %s263, 32, %s260, %s248
        $region44: #{tpu_custom_call.1} parent=31 // pred_fallthru
          _
      $region32: #{tpu_custom_call.1} parent=5 // pred_fallthru
        _
      %p266 = scmp.le.s32.totalorder 2, %s17
      // Predicated region
      $region45: #{tpu_custom_call.1} parent=5 // pred_check
        %p267 = pneg %p266
      $region46: #{tpu_custom_call.1} parent=5 // pred_check_branch
        %269 = sbr.rel (%p267) target = $region48
      $region47: #{tpu_custom_call.1} parent=5 // pred_region
        %s270 = ssub.s32 %s17, 2
        // Predicated region
        $region49: #{tpu_custom_call.1} parent=47 // pred_check
          %p271 = pneg %p130
        $region50: #{tpu_custom_call.1} parent=47 // pred_check_branch
          %273 = sbr.rel (%p271) target = $region52
        $region51: #{tpu_custom_call.1} parent=47 // pred_region
          %s274 = sand.u32 %s115, 1
          %s275 = scalar_lea.sflag [#allocation5], %s274
          %s276 = sand.u32 %s115, 1
          %s277 = smul.addr %s276, 2
          %s278 = scalar_lea.vmem [#allocation8], %s277
          %279 = dma.done %s275, 32
        $region52: #{tpu_custom_call.1} parent=47 // pred_fallthru
          _
      $region48: #{tpu_custom_call.1} parent=5 // pred_fallthru
        _
    $region6: #{tpu_custom_call.1} parent=1 // loop_footer
      %s21 = sadd.s32 1, %s17
    $region7: #{tpu_custom_call.1} parent=1 // loop_footer_branch
      %16 = sbr.rel target = $region3
    $region8: #{tpu_custom_call.1} parent=1 // loop_exit
      _
    %280 = vsyncpa [#allocation4], 1
    %s281 = scalar_lea.sflag [#allocation4], 1
    %282 = vsyncpa %s281, 1
    %283 = vsyncpa [#allocation5], 1
    %s284 = scalar_lea.sflag [#allocation5], 1
    %285 = vsyncpa %s284, 1
    %286 = vsyncpa [#allocation6], 1
    %s287 = scalar_lea.sflag [#allocation6], 1
    %288 = vsyncpa %s287, 1

</llo_original>
